<compile_context>
chip_gen: v6e
topology: v6e:2x2x1
jax: 0.10.0
libtpu: 0.0.40
codegen_flags: <defaults>
</compile_context>

<pallas_src>
import functools

import jax
import jax.numpy as jnp
from jax.experimental import pallas as pl
from jax.experimental.pallas import tpu as pltpu

_LANE = 128
_W_BIG = 2048            # lane-dense slab width for large inputs
_BR_BIG = 512            # block rows for large inputs (4 MiB f32 / block)
_SUB_ALIGN = 16          # sublane granularity safe for both f32 and bf16
_LN2 = 0.6931471805599453
_VMEM_LIMIT = 48 * 1024 * 1024   # < v7x 64 MiB physical, safe on v5e/v6e


def _cdiv(a, b):
    return (a + b - 1) // b


def _round_up(x, m):
    return ((x + m - 1) // m) * m


def _stable_logcosh(d):
    # log(cosh(d)) = |d| + log(1 + exp(-2|d|)) - log(2); never overflows.
    a = jnp.abs(d)
    return a + jnp.log(1.0 + jnp.exp(-2.0 * a)) - jnp.float32(_LN2)


def _elem_kernel(inp_ref, tgt_ref, out_ref):
    d = inp_ref[...].astype(jnp.float32) - tgt_ref[...].astype(jnp.float32)
    out_ref[...] = _stable_logcosh(d).astype(out_ref.dtype)


def _partial_sum_kernel(inp_ref, tgt_ref, psum_ref, *, n, block_rows, width,
                        masked):
    d = inp_ref[...].astype(jnp.float32) - tgt_ref[...].astype(jnp.float32)
    y = _stable_logcosh(d)
    if masked:  # static flag: only compiled in when the slab carries padding
        row = jax.lax.broadcasted_iota(jnp.int32, (block_rows, width), 0)
        col = jax.lax.broadcasted_iota(jnp.int32, (block_rows, width), 1)
        flat = (row + pl.program_id(0) * block_rows) * width + col
        y = jnp.where(flat < n, y, 0.0)
    # Per-block partial sums, reduced only along the cheap sublane axis (VPU
    # adds); the cross-lane collapse happens once, outside the kernel.
    psum_ref[...] = jnp.sum(y, axis=0, keepdims=True).reshape(psum_ref.shape)


def _plan(n):
    """Pick (lane_width, block_rows, padded_rows) for a flat element count n."""
    if n < _SUB_ALIGN * _W_BIG:
        # Tiny input: narrow slab, single small block, minimal padding.
        w = _LANE
        rows_needed = _cdiv(n, w)
        br = _round_up(max(rows_needed, 1), _SUB_ALIGN)
        rows = br
    else:
        w = _W_BIG
        rows_needed = _cdiv(n, w)
        br = min(_BR_BIG, _round_up(rows_needed, _SUB_ALIGN))
        rows = _round_up(rows_needed, br)
    return w, br, rows


def logcosh_loss(inp, tgt, reduction="none"):
    assert inp.shape == tgt.shape, "inp/tgt must have identical shapes"
    orig_shape = inp.shape
    out_dtype = jnp.result_type(inp.dtype, tgt.dtype)
    n = int(inp.size)

    w, br, rows = _plan(n)
    pad = rows * w - n

    def _prep(x):
        flat = x.astype(out_dtype).reshape(-1)
        if pad:
            flat = jnp.pad(flat, (0, pad))   # only when not block-aligned
        return flat.reshape(rows, w)

    x2 = _prep(inp)
    t2 = _prep(tgt)

    grid = (rows // br,)
    tile = pl.BlockSpec((br, w), lambda i: (i, 0))
    itemsize = jnp.dtype(out_dtype).itemsize
    cparams = pltpu.CompilerParams(
        dimension_semantics=("parallel",),
        vmem_limit_bytes=_VMEM_LIMIT,
    )

    if reduction == "none":
        out2 = pl.pallas_call(
            _elem_kernel,
            out_shape=jax.ShapeDtypeStruct((rows, w), out_dtype),
            grid_spec=pltpu.PrefetchScalarGridSpec(
                num_scalar_prefetch=0,
                grid=grid,
                in_specs=[tile, tile],
                out_specs=tile,
            ),
            compiler_params=cparams,
            cost_estimate=pl.CostEstimate(
                flops=6 * n, transcendentals=2 * n,
                bytes_accessed=3 * n * itemsize),
        )(x2, t2)
        if pad:
            return out2.reshape(-1)[:n].reshape(orig_shape)
        return out2.reshape(orig_shape)

    if reduction not in ("sum", "mean"):
        raise ValueError(f"unknown reduction: {reduction}")

    num_blocks = rows // br
    kernel = functools.partial(
        _partial_sum_kernel, n=n, block_rows=br, width=w, masked=pad > 0)
    psums = pl.pallas_call(
        kernel,
        out_shape=jax.ShapeDtypeStruct((num_blocks, 1, w), jnp.float32),
        grid_spec=pltpu.PrefetchScalarGridSpec(
            num_scalar_prefetch=0,
            grid=grid,
            in_specs=[tile, tile],
            out_specs=pl.BlockSpec((1, 1, w), lambda i: (i, 0, 0)),
        ),
        compiler_params=cparams,
        cost_estimate=pl.CostEstimate(
            flops=7 * n, transcendentals=2 * n,
            bytes_accessed=2 * n * itemsize),
    )(x2, t2)
    total = jnp.sum(psums, dtype=jnp.float32)

    if reduction == "sum":
        return total.astype(out_dtype)
    return (total / jnp.float32(n)).astype(out_dtype)


if __name__ == "__main__":
    key = jax.random.PRNGKey(0)
    k1, k2, k3, k4 = jax.random.split(key, 4)

    # Small NCHW example (block-aligned: exercises the zero-padding path).
    inp = jax.random.normal(k1, (2, 4, 16, 16), dtype=jnp.float32)
    tgt = jax.random.normal(k2, (2, 4, 16, 16), dtype=jnp.float32)

    out_none = jax.block_until_ready(logcosh_loss(inp, tgt, reduction="none"))
    out_sum = jax.block_until_ready(logcosh_loss(inp, tgt, reduction="sum"))
    out_mean = jax.block_until_ready(logcosh_loss(inp, tgt, reduction="mean"))

    ref = jnp.log(jnp.cosh(inp - tgt))
    assert out_none.shape == inp.shape
    assert jnp.allclose(out_none, ref, atol=1e-5, rtol=1e-5)
    assert jnp.allclose(out_sum, ref.sum(), atol=1e-3, rtol=1e-5)
    assert jnp.allclose(out_mean, ref.mean(), atol=1e-5, rtol=1e-5)

    # Ragged shape (not tile-aligned): exercises the in-kernel masked tail.
    inp2 = jax.random.normal(k3, (3, 5, 17, 9), dtype=jnp.float32)
    tgt2 = jax.random.normal(k4, (3, 5, 17, 9), dtype=jnp.float32)
    ref2 = jnp.log(jnp.cosh(inp2 - tgt2))
    o2n = jax.block_until_ready(logcosh_loss(inp2, tgt2, reduction="none"))
    o2s = jax.block_until_ready(logcosh_loss(inp2, tgt2, reduction="sum"))
    o2m = jax.block_until_ready(logcosh_loss(inp2, tgt2, reduction="mean"))
    assert o2n.shape == inp2.shape
    assert jnp.allclose(o2n, ref2, atol=1e-5, rtol=1e-5)
    assert jnp.allclose(o2s, ref2.sum(), atol=1e-3, rtol=1e-5)
    assert jnp.allclose(o2m, ref2.mean(), atol=1e-5, rtol=1e-5)

    print("KERNEL_OK")
</pallas_src>

<mosaic_0001>
module attributes {stable_mosaic.version = 11 : i64} {
  func.func @_elem_kernel(%arg0: i32, %arg1: memref<16x128xf32, #tpu.memory_space<vmem>>, %arg2: memref<16x128xf32, #tpu.memory_space<vmem>>, %arg3: memref<16x128xf32, #tpu.memory_space<vmem>>) attributes {dimension_semantics = [#tpu.dimension_semantics<parallel>], iteration_bounds = array<i64: 1>, scalar_prefetch = 0 : i64, scratch_operands = 0 : i64, tpu.core_type = #tpu.core_type<tc>, window_params = [{transform_indices = @transform_0, window_bounds = array<i64: 16, 128>}, {transform_indices = @transform_1, window_bounds = array<i64: 16, 128>}, {transform_indices = @transform_2, window_bounds = array<i64: 16, 128>}]} {
    %c0 = arith.constant 0 : index
    %c0_0 = arith.constant 0 : index
    %0 = vector.load %arg1[%c0, %c0_0] : memref<16x128xf32, #tpu.memory_space<vmem>>, vector<16x128xf32>
    %c0_1 = arith.constant 0 : index
    %c0_2 = arith.constant 0 : index
    %1 = vector.load %arg2[%c0_1, %c0_2] : memref<16x128xf32, #tpu.memory_space<vmem>>, vector<16x128xf32>
    %2 = arith.subf %0, %1 : vector<16x128xf32>
    %3 = math.absf %2 : vector<16x128xf32>
    %cst = arith.constant -2.000000e+00 : f32
    %4 = vector.broadcast %cst : f32 to vector<16x128xf32>
    %5 = arith.mulf %4, %3 : vector<16x128xf32>
    %6 = math.exp %5 : vector<16x128xf32>
    %cst_3 = arith.constant 1.000000e+00 : f32
    %7 = vector.broadcast %cst_3 : f32 to vector<16x128xf32>
    %8 = arith.addf %7, %6 : vector<16x128xf32>
    %9 = math.log %8 : vector<16x128xf32>
    %10 = arith.addf %3, %9 : vector<16x128xf32>
    %cst_4 = arith.constant 0.693147182 : f32
    %11 = vector.broadcast %cst_4 : f32 to vector<16x128xf32>
    %12 = arith.subf %10, %11 : vector<16x128xf32>
    %c0_5 = arith.constant 0 : index
    %c0_6 = arith.constant 0 : index
    %13 = vector.load %arg3[%c0_5, %c0_6] : memref<16x128xf32, #tpu.memory_space<vmem>>, vector<16x128xf32>
    tpu.vector_store %arg3[%c0_5, %c0_6], %12 {strides = array<i32>} : memref<16x128xf32, #tpu.memory_space<vmem>>, vector<16x128xf32>,
    return
  }
  func.func @transform_0(%arg0: i32) -> (i32, i32) {
    %c0_i32 = arith.constant 0 : i32
    %c0_i32_0 = arith.constant 0 : i32
    return %arg0, %c0_i32 : i32, i32
  }
  func.func @transform_1(%arg0: i32) -> (i32, i32) {
    %c0_i32 = arith.constant 0 : i32
    %c0_i32_0 = arith.constant 0 : i32
    return %arg0, %c0_i32 : i32, i32
  }
  func.func @transform_2(%arg0: i32) -> (i32, i32) {
    %c0_i32 = arith.constant 0 : i32
    %c0_i32_0 = arith.constant 0 : i32
    return %arg0, %c0_i32 : i32, i32
  }
}

</mosaic_0001>

<llo_original>
// kernel: tpu_custom_call.1
$region0: #{tpu_custom_call.1}
  #allocation0 [shape = 'u32[]', space=smem, size = 0x4, offset = 0x4, fixed_abs, tag = 'smem constant byte address 0x4 - core index']
  #allocation1 [shape = 'u32[144,128]{1,0:T(1,128)}', space=vmem, size = 0x12000, scoped, tag = 'internal scratch']
  %s0 = inlined_call_operand.hbm [shape: f32[16,128], index: 0, kind: input, shape index: {}]
  %s1 = inlined_call_operand.hbm [shape: f32[16,128], index: 1, kind: input, shape index: {}]
  %s2 = inlined_call_operand.hbm [shape: f32[16,128], index: 2, kind: output, shape index: {}]
  %s3 = sld [smem:[#allocation0]]
  $region26: #{tpu_custom_call.1} parent=0
    _
  %s5 = ssub.s32 1, %s3
  %s6 = scalar_select 0, %s5, %s3
  $region1: #{tpu_custom_call.1} parent=0
    #allocation2 [shape = 'u8[8192]{0}', space=vmem, size = 0x2000, scoped, tag = 'input window, operand 0, single buffered']
    #allocation3 [shape = 's32[1]{0}', space=sflag, size = 0x4, scoped, tag = 'scoped memory for tpu_custom_call.1']
    #allocation4 [shape = 's32[1]{0}', space=sflag, size = 0x4, scoped, tag = 'scoped memory for tpu_custom_call.1']
    #allocation5 [shape = 'u8[8192]{0}', space=vmem, size = 0x2000, scoped, tag = 'input window, operand 1, single buffered']
    #allocation6 [shape = 's32[1]{0}', space=sflag, size = 0x4, scoped, tag = 'scoped memory for tpu_custom_call.1']
    #allocation7 [shape = 'u8[8192]{0}', space=vmem, size = 0x2000, scoped, tag = 'output window, operand 0, single buffered']
    %7 = vsyncpa [#allocation3], 0
    %8 = vsyncpa [#allocation6], 0
    %9 = vsyncpa [#allocation4], 0
    // Predicated region
    $region2: #{tpu_custom_call.1} parent=1 // pred_check
      _
    $region3: #{tpu_custom_call.1} parent=1 // pred_check_branch
      %11 = sbr.rel (0) target = $region5
    $region4: #{tpu_custom_call.1} parent=1 // pred_region
      %s13 = ssub.s32 256, 256
      %14 = vsyncadd [#allocation3], %s13
      %s15 = sshll.u32 [#allocation2], 4
      %s16 = int_to_ptr.vmem [resolvable:$true] %s15
      %21 = dma.hbm_to_vmem [thread:$0]  %s0, 256, %s16, [#allocation3], 128, 128, 8
    $region5: #{tpu_custom_call.1} parent=1 // pred_fallthru
      _
    // Predicated region
    $region6: #{tpu_custom_call.1} parent=1 // pred_check
      _
    $region7: #{tpu_custom_call.1} parent=1 // pred_check_branch
      %23 = sbr.rel (0) target = $region9
    $region8: #{tpu_custom_call.1} parent=1 // pred_region
      %s25 = ssub.s32 256, 256
      %26 = vsyncadd [#allocation6], %s25
      %s27 = sshll.u32 [#allocation5], 4
      %s28 = int_to_ptr.vmem [resolvable:$true] %s27
      %33 = dma.hbm_to_vmem [thread:$0]  %s1, 256, %s28, [#allocation6], 128, 128, 8
    $region9: #{tpu_custom_call.1} parent=1 // pred_fallthru
      _
    // Predicated region
    $region10: #{tpu_custom_call.1} parent=1 // pred_check
      _
    $region11: #{tpu_custom_call.1} parent=1 // pred_check_branch
      %35 = sbr.rel (0) target = $region13
    $region12: #{tpu_custom_call.1} parent=1 // pred_region
      %36 = dma.done [#allocation3], 256
    $region13: #{tpu_custom_call.1} parent=1 // pred_fallthru
      _
    // Predicated region
    $region14: #{tpu_custom_call.1} parent=1 // pred_check
      _
    $region15: #{tpu_custom_call.1} parent=1 // pred_check_branch
      %38 = sbr.rel (0) target = $region17
    $region16: #{tpu_custom_call.1} parent=1 // pred_region
      %39 = dma.done [#allocation6], 256
    $region17: #{tpu_custom_call.1} parent=1 // pred_fallthru
      _
    %v40 = vld [vmem:[#allocation2] sm:$0xff]
    %v41 = vld [vmem:[#allocation2 + $0x8] sm:$0xff]
    %v42 = vld [vmem:[#allocation5] sm:$0xff]
    %v43 = vld [vmem:[#allocation5 + $0x8] sm:$0xff]
    %v44 = vsub.f32 %v40, %v42
    %v45 = vsub.f32 %v41, %v43
    %v46 = vand.u32 2147483647, %v44
    %v47 = vand.u32 2147483647, %v45
    %v48 = vmul.f32 %v46, -2.0
    %v49 = vmul.f32 %v47, -2.0
    %v50 = vmul.f32 %v48, 1.442695
    %v51 = vpow.pop %v50
    %v52 = vmul.f32 %v49, 1.442695
    %v53 = vpow.pop %v52
    %v54 = vadd.f32 %v51, 1.0
    %v55 = vadd.f32 %v53, 1.0
    %v56 = vlog2.pop %v54
    %v57 = vmul.f32 %v56, 0.6931472
    %v58 = vlog2.pop %v55
    %v59 = vmul.f32 %v58, 0.6931472
    %v60 = vadd.f32 %v46, %v57
    %v61 = vadd.f32 %v47, %v59
    %v62 = vsub.f32 %v60, 0.6931472
    %v63 = vsub.f32 %v61, 0.6931472
    %64 = vst [vmem:[#allocation7] sm:$0xff] %v62
    %65 = vst [vmem:[#allocation7 + $0x8] sm:$0xff] %v63
    // Predicated region
    $region18: #{tpu_custom_call.1} parent=1 // pred_check
      _
    $region19: #{tpu_custom_call.1} parent=1 // pred_check_branch
      %67 = sbr.rel (0) target = $region21
    $region20: #{tpu_custom_call.1} parent=1 // pred_region
      %s69 = ssub.s32 256, 256
      %70 = vsyncadd [#allocation4], %s69
      %s71 = sshll.u32 [#allocation7], 4
      %s72 = int_to_ptr.vmem [resolvable:$true] %s71
      %77 = dma.vmem_to_hbm [thread:$0]  %s72, 256, %s2, [#allocation4], 128, 128, 8
    $region21: #{tpu_custom_call.1} parent=1 // pred_fallthru
      _
    // Predicated region
    $region22: #{tpu_custom_call.1} parent=1 // pred_check
      _
    $region23: #{tpu_custom_call.1} parent=1 // pred_check_branch
      %79 = sbr.rel (0) target = $region25
    $region24: #{tpu_custom_call.1} parent=1 // pred_region
      %80 = dma.done [#allocation4], 256
    $region25: #{tpu_custom_call.1} parent=1 // pred_fallthru
      _
    %81 = vsyncpa [#allocation3], 1
    %82 = vsyncpa [#allocation6], 1
    %83 = vsyncpa [#allocation4], 1

</llo_original>
